<compile_context>
chip_gen: v6e
topology: v6e:2x2x1
jax: 0.10.0
libtpu: 0.0.40
codegen_flags: <defaults>
</compile_context>

<pallas_src>
import functools

import jax
import jax.numpy as jnp
from jax.experimental import pallas as pl
from jax.experimental.pallas import tpu as pltpu

_LANES = 128


def _round_up(x, m):
    return ((x + m - 1) // m) * m


def _image_space_loss_kernel(data_ref, out_ref, acc_ref, *, loss_type, beta, scale):
    i = pl.program_id(1)

    @pl.when(i == 0)
    def _():
        acc_ref[...] = jnp.zeros_like(acc_ref)

    pred = data_ref[0]                       # (tm, 128) f32

    if loss_type == "smooth_l1":
        base = data_ref[1]
        size = data_ref[2]
        w = data_ref[3]
        # coder.decode(anchors, pred) - target  ==  (ctr - target) + pred * size
        diff = jnp.abs(base + pred * size)
        loss = jnp.where(diff < beta, (0.5 / beta) * diff * diff, diff - 0.5 * beta)
        acc_ref[...] += loss * w
    else:
        # 'l1' / 'l2': weight already folded into base_w / size_w (weight >= 0).
        base_w = data_ref[1]
        size_w = data_ref[2]
        acc_ref[...] += jnp.abs(base_w + pred * size_w)

    @pl.when(i == pl.num_programs(1) - 1)
    def _():
        # single cross-lane/sublane reduce per slice; loss_weight, /image_resolution
        # and the 'mean' 1/numel are folded into one scalar multiply.
        out_ref[0, 0] = jnp.sum(acc_ref[...]) * scale


def image_space_loss(pred, target_2d, anchors, weight, *,
                     loss_type="l1", beta=2.0, image_resolution=256.0,
                     loss_weight=1.0, tm=2048, num_slices=1):
    """pred, target_2d: (N, K2); anchors: (N, 4) (x1,y1,x2,y2); weight: (N,) or (N, K2).

    NOTE: the l1/l2 fast path folds `weight` into the decode constants, which assumes
    weight >= 0 (true for keypoint visibility weights).
    """
    assert loss_type in ("l1", "l2", "smooth_l1")
    n, k2 = pred.shape
    assert k2 % 2 == 0
    numel = n * k2

    # --- plain-JAX glue: coder.decode anchor expansion (center / size) --------------
    x1, y1, x2, y2 = anchors[:, 0], anchors[:, 1], anchors[:, 2], anchors[:, 3]
    cxy = jnp.stack([(x1 + x2) * 0.5, (y1 + y2) * 0.5], axis=-1)          # (n, 2)
    swh = jnp.stack([x2 - x1, y2 - y1], axis=-1)                          # (n, 2)
    ctr = jnp.broadcast_to(cxy[:, None, :], (n, k2 // 2, 2)).reshape(n, k2)
    size = jnp.broadcast_to(swh[:, None, :], (n, k2 // 2, 2)).reshape(n, k2)

    if weight.ndim == 1:
        weight = weight[:, None]
    w_f = jnp.broadcast_to(weight, (n, k2)).astype(jnp.float32)

    pred_f = pred.astype(jnp.float32)
    base = ctr.astype(jnp.float32) - target_2d.astype(jnp.float32)
    size = size.astype(jnp.float32)

    if loss_type == "smooth_l1":
        planes = [pred_f, base, size, w_f]                 # 4-input path
    else:
        # fold weight (>= 0) into the constants: |d| * w == |d * w|
        planes = [pred_f, base * w_f, size * w_f]          # 3-input path
    num_inputs = len(planes)

    # --- lane-dense layout: one (num_inputs, rows_padded, 128) f32 slab -------------
    rows = pl.cdiv(numel, _LANES)
    rows_per_slice = pl.cdiv(rows, num_slices)
    tm_eff = max(8, min(_round_up(tm, 8), _round_up(rows_per_slice, 8)))
    blocks_per_slice = pl.cdiv(rows_per_slice, tm_eff)
    rows_padded = num_slices * blocks_per_slice * tm_eff
    padded_numel = rows_padded * _LANES

    # single fused stack (+ pad only if needed) -> one wrapper-side HBM write
    data = jnp.stack([p.reshape(-1) for p in planes], axis=0)            # (I, numel)
    if padded_numel != numel:
        # zero padding contributes 0 to the sum on every path (base/size/w padded to 0)
        data = jnp.pad(data, ((0, 0), (0, padded_numel - numel)))
    data = data.reshape(num_inputs, rows_padded, _LANES)

    kernel = functools.partial(
        _image_space_loss_kernel,
        loss_type=loss_type,
        beta=float(beta),
        # 'mean' reduction (avg_factor=None) + weight/image_resolution + loss_weight
        scale=float(loss_weight) / (float(image_resolution) * float(numel)),
    )

    data_spec = pl.BlockSpec(
        (num_inputs, tm_eff, _LANES),
        lambda c, i: (0, c * blocks_per_slice + i, 0),
    )

    out = pl.pallas_call(
        kernel,
        out_shape=jax.ShapeDtypeStruct((num_slices, 1), jnp.float32),
        grid_spec=pltpu.PrefetchScalarGridSpec(
            num_scalar_prefetch=0,
            grid=(num_slices, blocks_per_slice),
            in_specs=[data_spec],
            out_specs=pl.BlockSpec((1, 1), lambda c, i: (c, 0),
                                   memory_space=pltpu.SMEM),
            scratch_shapes=[pltpu.VMEM((tm_eff, _LANES), jnp.float32)],
        ),
        compiler_params=pltpu.CompilerParams(
            dimension_semantics=("parallel", "arbitrary"),
            vmem_limit_bytes=32 * 1024 * 1024,
        ),
    )(data)

    # combine the per-slice (per-TensorCore) partial sums
    return jnp.sum(out)


# ------------------------------- reference & tests ----------------------------------
def _reference(pred, target_2d, anchors, weight, *, loss_type="l1", beta=2.0,
               image_resolution=256.0, loss_weight=1.0):
    n, k2 = pred.shape
    x1, y1, x2, y2 = anchors[:, 0], anchors[:, 1], anchors[:, 2], anchors[:, 3]
    ctr = jnp.tile(jnp.stack([(x1 + x2) * 0.5, (y1 + y2) * 0.5], -1), (1, k2 // 2))
    size = jnp.tile(jnp.stack([x2 - x1, y2 - y1], -1), (1, k2 // 2))
    decoded = ctr + pred * size
    if weight.ndim == 1:
        weight = jnp.broadcast_to(weight[:, None], (n, k2))
    w = weight / image_resolution
    diff = jnp.abs(decoded - target_2d)
    if loss_type == "smooth_l1":
        loss = jnp.where(diff < beta, 0.5 * diff * diff / beta, diff - 0.5 * beta)
    else:
        loss = diff
    return loss_weight * jnp.mean(loss * w)


def _make_inputs(key, n, num_kp):
    k1, k2k, k3, k4, k5 = jax.random.split(key, 5)
    K2 = num_kp * 2
    pred = jax.random.normal(k1, (n, K2), dtype=jnp.float32) * 0.1       # deltas
    target_2d = jax.random.uniform(k2k, (n, K2), dtype=jnp.float32,
                                   minval=0.0, maxval=256.0)
    xy1 = jax.random.uniform(k3, (n, 2), dtype=jnp.float32,
                             minval=0.0, maxval=128.0)
    wh = jax.random.uniform(k4, (n, 2), dtype=jnp.float32,
                            minval=16.0, maxval=96.0)
    anchors = jnp.concatenate([xy1, xy1 + wh], axis=-1)
    weight = jax.random.uniform(k5, (n, K2), dtype=jnp.float32,
                                minval=0.0, maxval=1.0)
    return pred, target_2d, anchors, weight


if __name__ == "__main__":
    key = jax.random.PRNGKey(0)
    ka, kb = jax.random.split(key)

    # --- small case (single block, default num_slices=1) ----------------------------
    pred, target_2d, anchors, weight = _make_inputs(ka, n=16, num_kp=8)

    out = jax.block_until_ready(
        image_space_loss(pred, target_2d, anchors, weight, loss_type="l1"))
    ref = _reference(pred, target_2d, anchors, weight, loss_type="l1")
    assert jnp.allclose(out, ref, rtol=1e-5, atol=1e-6), (out, ref)

    out_l2 = jax.block_until_ready(
        image_space_loss(pred, target_2d, anchors, weight, loss_type="l2"))
    ref_l2 = _reference(pred, target_2d, anchors, weight, loss_type="l2")
    assert jnp.allclose(out_l2, ref_l2, rtol=1e-5, atol=1e-6), (out_l2, ref_l2)

    out_s = jax.block_until_ready(
        image_space_loss(pred, target_2d, anchors, weight,
                         loss_type="smooth_l1", beta=2.0))
    ref_s = _reference(pred, target_2d, anchors, weight,
                       loss_type="smooth_l1", beta=2.0)
    assert jnp.allclose(out_s, ref_s, rtol=1e-5, atol=1e-6), (out_s, ref_s)

    # --- padded / multi-block / 2-slice path (N*K2 not a multiple of 128) -----------
    pred2, target2, anchors2, weight2 = _make_inputs(kb, n=322, num_kp=8)
    out2 = jax.block_until_ready(
        image_space_loss(pred2, target2, anchors2, weight2,
                         loss_type="l1", tm=8, num_slices=2))
    ref2 = _reference(pred2, target2, anchors2, weight2, loss_type="l1")
    assert jnp.allclose(out2, ref2, rtol=1e-4, atol=1e-6), (out2, ref2)

    out2s = jax.block_until_ready(
        image_space_loss(pred2, target2, anchors2, weight2,
                         loss_type="smooth_l1", beta=2.0, tm=8, num_slices=2))
    ref2s = _reference(pred2, target2, anchors2, weight2,
                       loss_type="smooth_l1", beta=2.0)
    assert jnp.allclose(out2s, ref2s, rtol=1e-4, atol=1e-6), (out2s, ref2s)

    print("KERNEL_OK")
</pallas_src>

<mosaic_0001>
module attributes {stable_mosaic.version = 11 : i64} {
  func.func @_image_space_loss_kernel(%arg0: i32, %arg1: i32, %arg2: memref<3x8x128xf32, #tpu.memory_space<vmem>>, %arg3: memref<1x1xf32, #tpu.memory_space<smem>>, %arg4: memref<8x128xf32, #tpu.memory_space<vmem>>) attributes {dimension_semantics = [#tpu.dimension_semantics<parallel>, #tpu.dimension_semantics<arbitrary>], iteration_bounds = array<i64: 1, 1>, scalar_prefetch = 0 : i64, scratch_operands = 1 : i64, tpu.core_type = #tpu.core_type<tc>, window_params = [{transform_indices = @transform_0, window_bounds = array<i64: 3, 8, 128>}, {transform_indices = @transform_1, window_bounds = array<i64: 1, 1>}]} {
    %c0_i32 = arith.constant 0 : i32
    %0 = arith.cmpi eq, %arg1, %c0_i32 : i32
    %1 = arith.extui %0 : i1 to i32
    %c0_i32_0 = arith.constant 0 : i32
    %2 = arith.cmpi ne, %1, %c0_i32_0 : i32
    scf.if %2 {
      %cst = arith.constant 0.000000e+00 : f32
      %18 = vector.broadcast %cst : f32 to vector<8x128xf32>
      %c0_13 = arith.constant 0 : index
      %c0_14 = arith.constant 0 : index
      %19 = vector.load %arg4[%c0_13, %c0_14] : memref<8x128xf32, #tpu.memory_space<vmem>>, vector<8x128xf32>
      tpu.vector_store %arg4[%c0_13, %c0_14], %18 {strides = array<i32>} : memref<8x128xf32, #tpu.memory_space<vmem>>, vector<8x128xf32>,
    } else {
    }
    %c0 = arith.constant 0 : index
    %c0_1 = arith.constant 0 : index
    %c0_2 = arith.constant 0 : index
    %3 = vector.load %arg2[%c0, %c0_1, %c0_2] : memref<3x8x128xf32, #tpu.memory_space<vmem>>, vector<1x8x128xf32>
    %4 = vector.shape_cast %3 : vector<1x8x128xf32> to vector<8x128xf32>
    %c1 = arith.constant 1 : index
    %c0_3 = arith.constant 0 : index
    %c0_4 = arith.constant 0 : index
    %5 = vector.load %arg2[%c1, %c0_3, %c0_4] : memref<3x8x128xf32, #tpu.memory_space<vmem>>, vector<1x8x128xf32>
    %6 = vector.shape_cast %5 : vector<1x8x128xf32> to vector<8x128xf32>
    %c2 = arith.constant 2 : index
    %c0_5 = arith.constant 0 : index
    %c0_6 = arith.constant 0 : index
    %7 = vector.load %arg2[%c2, %c0_5, %c0_6] : memref<3x8x128xf32, #tpu.memory_space<vmem>>, vector<1x8x128xf32>
    %8 = vector.shape_cast %7 : vector<1x8x128xf32> to vector<8x128xf32>
    %c0_7 = arith.constant 0 : index
    %c0_8 = arith.constant 0 : index
    %9 = vector.load %arg4[%c0_7, %c0_8] : memref<8x128xf32, #tpu.memory_space<vmem>>, vector<8x128xf32>
    %10 = arith.mulf %4, %8 : vector<8x128xf32>
    %11 = arith.addf %6, %10 : vector<8x128xf32>
    %12 = math.absf %11 : vector<8x128xf32>
    %13 = arith.addf %9, %12 : vector<8x128xf32>
    %c0_9 = arith.constant 0 : index
    %c0_10 = arith.constant 0 : index
    %14 = vector.load %arg4[%c0_9, %c0_10] : memref<8x128xf32, #tpu.memory_space<vmem>>, vector<8x128xf32>
    tpu.vector_store %arg4[%c0_9, %c0_10], %13 {strides = array<i32>} : memref<8x128xf32, #tpu.memory_space<vmem>>, vector<8x128xf32>,
    %c0_i32_11 = arith.constant 0 : i32
    %15 = arith.cmpi eq, %arg1, %c0_i32_11 : i32
    %16 = arith.extui %15 : i1 to i32
    %c0_i32_12 = arith.constant 0 : i32
    %17 = arith.cmpi ne, %16, %c0_i32_12 : i32
    scf.if %17 {
      %c0_13 = arith.constant 0 : index
      %c0_14 = arith.constant 0 : index
      %18 = vector.load %arg4[%c0_13, %c0_14] : memref<8x128xf32, #tpu.memory_space<vmem>>, vector<8x128xf32>
      %19 = vector.shape_cast %18 : vector<8x128xf32> to vector<1x8x128xf32>
      %cst = arith.constant dense<0.000000e+00> : vector<1xf32>
      %20 = vector.multi_reduction <add>, %19, %cst [1, 2] : vector<1x8x128xf32> to vector<1xf32>
      %21 = vector.shape_cast %20 : vector<1xf32> to vector<1x1x1xf32>
      %22 = vector.extract %21[0, 0, 0] : f32 from vector<1x1x1xf32>
      %cst_15 = arith.constant 1.52587891E-5 : f32
      %23 = arith.mulf %22, %cst_15 : f32
      %c0_16 = arith.constant 0 : index
      %c0_17 = arith.constant 0 : index
      %24 = memref.load %arg3[%c0_16, %c0_17] : memref<1x1xf32, #tpu.memory_space<smem>>
      memref.store %23, %arg3[%c0_16, %c0_17] : memref<1x1xf32, #tpu.memory_space<smem>>
    } else {
    }
    return
  }
  func.func @transform_0(%arg0: i32, %arg1: i32) -> (i32, i32, i32) {
    %c1_i32 = arith.constant 1 : i32
    %0 = arith.muli %arg0, %c1_i32 : i32
    %1 = arith.addi %0, %arg1 : i32
    %c0_i32 = arith.constant 0 : i32
    %c0_i32_0 = arith.constant 0 : i32
    %c0_i32_1 = arith.constant 0 : i32
    return %c0_i32, %1, %c0_i32_0 : i32, i32, i32
  }
  func.func @transform_1(%arg0: i32, %arg1: i32) -> (i32, i32) {
    %c0_i32 = arith.constant 0 : i32
    %c0_i32_0 = arith.constant 0 : i32
    return %arg0, %c0_i32 : i32, i32
  }
}

</mosaic_0001>

<llo_original>
// kernel: tpu_custom_call.1
$region0: #{tpu_custom_call.1}
  #allocation0 [shape = 'u32[]', space=smem, size = 0x4, offset = 0x4, fixed_abs, tag = 'smem constant byte address 0x4 - core index']
  #allocation1 [shape = 'u32[144,128]{1,0:T(1,128)}', space=vmem, size = 0x12000, scoped, tag = 'internal scratch']
  #allocation2 [shape = 'f32[8,128]{1,0:T(8,128)}', space=vmem, size = 0x1000, scoped, tag = 'scratch operand']
  %s0 = inlined_call_operand.hbm [shape: f32[3,8,128], index: 0, kind: input, shape index: {}]
  %s1 = inlined_call_operand.hbm [shape: f32[1,1], index: 1, kind: output, shape index: {}]
  %s2 = sld [smem:[#allocation0]]
  $region26: #{tpu_custom_call.1} parent=0
    _
  %s4 = ssub.s32 1, %s2
  %s5 = scalar_select 0, %s4, %s2
  $region1: #{tpu_custom_call.1} parent=0
    #allocation3 [shape = 'u8[12288]{0}', space=vmem, size = 0x3000, scoped, tag = 'input window, operand 0, single buffered']
    #allocation4 [shape = 's32[1]{0}', space=sflag, size = 0x4, scoped, tag = 'scoped memory for tpu_custom_call.1']
    #allocation5 [shape = 's32[1]{0}', space=sflag, size = 0x4, scoped, tag = 'scoped memory for tpu_custom_call.1']
    #allocation6 [shape = 'u8[512]{0}', space=smem, size = 0x200, scoped, tag = 'output window, operand 0, single buffered']
    %6 = vsyncpa [#allocation4], 0
    %7 = vsyncpa [#allocation5], 0
    // Predicated region
    $region2: #{tpu_custom_call.1} parent=1 // pred_check
      _
    $region3: #{tpu_custom_call.1} parent=1 // pred_check_branch
      %9 = sbr.rel (0) target = $region5
    $region4: #{tpu_custom_call.1} parent=1 // pred_region
      %s10 = sadd.s32 0, 0
      %s12 = ssub.s32 384, 384
      %13 = vsyncadd [#allocation4], %s12
      %s14 = smul.addr %s10, 128
      %s15 = scalar_lea.hbm %s0, %s14
      %s16 = sshll.u32 [#allocation3], 4
      %s17 = int_to_ptr.vmem [resolvable:$true] %s16
      %22 = dma.hbm_to_vmem [thread:$0]  %s15, 384, %s17, [#allocation4], 128, 128, 8
    $region5: #{tpu_custom_call.1} parent=1 // pred_fallthru
      _
    // Predicated region
    $region6: #{tpu_custom_call.1} parent=1 // pred_check
      _
    $region7: #{tpu_custom_call.1} parent=1 // pred_check_branch
      %24 = sbr.rel (0) target = $region9
    $region8: #{tpu_custom_call.1} parent=1 // pred_region
      %25 = dma.done [#allocation4], 384
    $region9: #{tpu_custom_call.1} parent=1 // pred_fallthru
      _
    %s26 = sadd.s32 0, 0
    %p27 = scmp.eq.s32.totalorder 0, 0
    // Predicated region
    $region10: #{tpu_custom_call.1} parent=1 // pred_check
      %p28 = pneg %p27
    $region11: #{tpu_custom_call.1} parent=1 // pred_check_branch
      %30 = sbr.rel (%p28) target = $region13
    $region12: #{tpu_custom_call.1} parent=1 // pred_region
      %31 = vst [vmem:[#allocation2] sm:$0xff] 0.0
    $region13: #{tpu_custom_call.1} parent=1 // pred_fallthru
      _
    %v32 = vld [vmem:[#allocation3] sm:$0xff]
    %s33 = scalar_lea.vmem [#allocation3], 8
    %v34 = vld [vmem:[%s33] sm:$0xff]
    %s35 = scalar_lea.vmem [#allocation3], 16
    %v36 = vld [vmem:[%s35] sm:$0xff]
    %v37 = vld [vmem:[#allocation2] sm:$0xff]
    %v38 = vmul.f32 %v32, %v36
    %v39 = vadd.f32 %v34, %v38
    %v40 = vand.u32 2147483647, %v39
    %v41 = vadd.f32 %v37, %v40
    %42 = vst [vmem:[#allocation2] sm:$0xff] %v41
    // Predicated region
    $region14: #{tpu_custom_call.1} parent=1 // pred_check
      %p43 = pneg %p27
    $region15: #{tpu_custom_call.1} parent=1 // pred_check_branch
      %45 = sbr.rel (%p43) target = $region17
    $region16: #{tpu_custom_call.1} parent=1 // pred_region
      %v46 = vld [vmem:[#allocation2] sm:$0xff]
      %47 = vadd.xlane.f32.xlu0 %v46
      %v48 = vpop.xlane.xlu0 %47
      %v49 = vrot.slane %v48, 4
      %v50 = vadd.f32 %v48, %v49
      %v51 = vrot.slane %v50, 2
      %v52 = vadd.f32 %v50, %v51
      %v53 = vrot.slane %v52, 1
      %v54 = vadd.f32 %v52, %v53
      %s55 = vtos %v54
      %s56 = smul.f32 %s55, 1.5258789e-05
      %s57 = scalar_lea.smem [#allocation6], 0
      %58 = sst [smem:[%s57]] %s56
    $region17: #{tpu_custom_call.1} parent=1 // pred_fallthru
      _
    // Predicated region
    $region18: #{tpu_custom_call.1} parent=1 // pred_check
      _
    $region19: #{tpu_custom_call.1} parent=1 // pred_check_branch
      %60 = sbr.rel (0) target = $region21
    $region20: #{tpu_custom_call.1} parent=1 // pred_region
      %s62 = ssub.s32 16, 16
      %63 = vsyncadd [#allocation5], %s62
      %66 = dma.smem_to_hbm [#allocation6], 16, %s1, [#allocation5]
    $region21: #{tpu_custom_call.1} parent=1 // pred_fallthru
      _
    // Predicated region
    $region22: #{tpu_custom_call.1} parent=1 // pred_check
      _
    $region23: #{tpu_custom_call.1} parent=1 // pred_check_branch
      %68 = sbr.rel (0) target = $region25
    $region24: #{tpu_custom_call.1} parent=1 // pred_region
      %69 = dma.done [#allocation5], 16
    $region25: #{tpu_custom_call.1} parent=1 // pred_fallthru
      _
    %70 = sfence
    %71 = vsyncpa [#allocation4], 1
    %72 = vsyncpa [#allocation5], 1

</llo_original>
